<compile_context>
chip_gen: v7x
topology: tpu7x:2x2x1
jax: 0.10.0
libtpu: 0.0.40
codegen_flags: <defaults>
</compile_context>

<pallas_src>
import functools

import jax
import jax.numpy as jnp
from jax.experimental import pallas as pl
from jax.experimental.pallas import tpu as pltpu


def _round_up(x, m):
    return ((x + m - 1) // m) * m


def _cdiv(a, b):
    return (a + b - 1) // b


def _choose_tile_n(n, c):
    """Rows per tile: big enough to amortize per-step overhead, small enough
    that the double-buffered logits tiles fit comfortably in v7x VMEM."""
    max_tile_bytes = 4 * 1024 * 1024           # per logits buffer (x2 dbl-buf)
    tile = max_tile_bytes // (4 * c)
    tile = max(16, min(2048, tile))
    tile = (tile // 16) * 16                   # sublane-friendly for f32 and bf16
    tile = min(tile, _round_up(n, 16))
    return max(16, tile)


def _focal_rows(logits_f32, targets_i32, alpha, gamma):
    """Per-row focal loss f = alpha * (1 - pt)**gamma * ce, shape (tn, 1) f32."""
    tn, c = logits_f32.shape
    # Numerically-stable log-sum-exp (== F.cross_entropy, reduction='none').
    m = jnp.max(logits_f32, axis=-1, keepdims=True)          # (tn, 1)
    shifted = logits_f32 - m
    sumexp = jnp.sum(jnp.exp(shifted), axis=-1, keepdims=True)

    # Gather target-class logit via one-hot (no lane gather on TPU).
    class_ids = jax.lax.broadcasted_iota(jnp.int32, (tn, c), 1)
    onehot = (class_ids == targets_i32).astype(jnp.float32)
    tgt_shifted = jnp.sum(onehot * shifted, axis=-1, keepdims=True)

    ce = jnp.log(sumexp) - tgt_shifted                         # per-sample CE
    pt = jnp.exp(-ce)                                          # == torch.exp(-ce)
    q = jnp.maximum(1.0 - pt, 0.0)                             # clamp: no NaN
    if gamma == 2.0:
        w = q * q                                              # VPU mul, not pow
    else:
        w = q ** gamma
    return alpha * w * ce                                      # (tn, 1)


def _focal_sum_kernel(logits_ref, targets_ref, out_ref, *,
                      alpha, gamma, n_valid, tiles_per_split, tile_n):
    t = pl.program_id(1)

    @pl.when(t == 0)
    def _():
        out_ref[...] = jnp.zeros_like(out_ref)

    f = _focal_rows(logits_ref[...].astype(jnp.float32), targets_ref[...],
                    alpha, gamma)

    # Mask rows past the true batch size (zero-padded tiles).
    gtile = pl.program_id(0) * tiles_per_split + t
    row = gtile * tile_n + jax.lax.broadcasted_iota(jnp.int32, (tile_n, 1), 0)
    f = jnp.where(row < n_valid, f, 0.0)

    out_ref[...] += jnp.sum(f)                 # broadcast-add into (1, 8, 128)


def _focal_none_kernel(logits_ref, targets_ref, out_ref, *, alpha, gamma):
    out_ref[...] = _focal_rows(logits_ref[...].astype(jnp.float32),
                               targets_ref[...], alpha, gamma)


def focal_loss(logits, targets, alpha=0.25, gamma=2.0, reduction="mean"):
    """logits: [N, C] float32/bfloat16, targets: [N] int.
    Returns scalar f32 for 'mean'/'sum', else per-sample vector [N] f32."""
    n, c = logits.shape
    targets_2d = targets.astype(jnp.int32).reshape(n, 1)

    tile_n = _choose_tile_n(n, c)
    num_tiles = _cdiv(n, tile_n)
    vmem_params = pltpu.CompilerParams(
        dimension_semantics=("parallel", "arbitrary"),
        vmem_limit_bytes=32 * 1024 * 1024)

    if reduction not in ("mean", "sum"):
        # reduction='none' path: per-sample focal loss vector.
        # TODO(synk): last output dim is 1 (masked stores); tiny output so OK.
        n_pad = num_tiles * tile_n
        if n_pad != n:
            logits_p = jnp.pad(logits, ((0, n_pad - n), (0, 0)))
            targets_p = jnp.pad(targets_2d, ((0, n_pad - n), (0, 0)))
        else:
            logits_p, targets_p = logits, targets_2d
        kernel = functools.partial(_focal_none_kernel,
                                   alpha=float(alpha), gamma=float(gamma))
        out = pl.pallas_call(
            kernel,
            out_shape=jax.ShapeDtypeStruct((n_pad, 1), jnp.float32),
            grid=(num_tiles,),
            in_specs=[pl.BlockSpec((tile_n, c), lambda t: (t, 0)),
                      pl.BlockSpec((tile_n, 1), lambda t: (t, 0))],
            out_specs=pl.BlockSpec((tile_n, 1), lambda t: (t, 0)),
            compiler_params=pltpu.CompilerParams(
                dimension_semantics=("parallel",),
                vmem_limit_bytes=32 * 1024 * 1024),
        )(logits_p, targets_p)
        return out[:n, 0]

    num_splits = 2 if num_tiles >= 2 else 1          # 2 TensorCores on v7x
    tiles_per_split = _cdiv(num_tiles, num_splits)
    n_pad = num_splits * tiles_per_split * tile_n

    if n_pad != n:
        logits = jnp.pad(logits, ((0, n_pad - n), (0, 0)))
        targets_2d = jnp.pad(targets_2d, ((0, n_pad - n), (0, 0)))

    kernel = functools.partial(
        _focal_sum_kernel, alpha=float(alpha), gamma=float(gamma),
        n_valid=n, tiles_per_split=tiles_per_split, tile_n=tile_n)

    # TODO(synk): lane-pack C<128 logits (k=128//C samples per vreg row) for
    # full lane utilization; needs segmented lane reductions, skipped here.
    # TODO(synk): add a C-axis grid with online logsumexp for very large C.
    out = pl.pallas_call(
        kernel,
        out_shape=jax.ShapeDtypeStruct((num_splits, 8, 128), jnp.float32),
        grid=(num_splits, tiles_per_split),
        in_specs=[
            pl.BlockSpec((tile_n, c), lambda s, t: (s * tiles_per_split + t, 0)),
            pl.BlockSpec((tile_n, 1), lambda s, t: (s * tiles_per_split + t, 0)),
        ],
        out_specs=pl.BlockSpec((1, 8, 128), lambda s, t: (s, 0, 0)),
        compiler_params=vmem_params,
    )(logits, targets_2d)

    total = jnp.sum(out[:, 0, 0])                    # one partial sum per split
    if reduction == "mean":
        return total / jnp.float32(n)
    return total                                      # 'sum'


def _focal_loss_ref(logits, targets, alpha=0.25, gamma=2.0, reduction="mean"):
    logits = logits.astype(jnp.float32)
    logp = jax.nn.log_softmax(logits, axis=-1)
    ce = -jnp.take_along_axis(logp, targets[:, None], axis=-1)[:, 0]
    pt = jnp.exp(-ce)
    f = alpha * (1.0 - pt) ** gamma * ce
    if reduction == "mean":
        return jnp.mean(f)
    elif reduction == "sum":
        return jnp.sum(f)
    return f


if __name__ == "__main__":
    key = jax.random.PRNGKey(0)
    k1, k2, k3, k4 = jax.random.split(key, 4)

    # Small case consistent with the module: [N, C] logits, [N] class targets.
    N, C = 8, 32
    logits = jax.random.normal(k1, (N, C), dtype=jnp.float32)
    targets = jax.random.randint(k2, (N,), 0, C, dtype=jnp.int32)
    loss = focal_loss(logits, targets)
    jax.block_until_ready(loss)
    ref = _focal_loss_ref(logits, targets)
    assert jnp.allclose(loss, ref, atol=1e-5, rtol=1e-5), (loss, ref)

    # Larger case: exercises N-tiling, the 2-way core split and padded-row masking.
    N2, C2 = 3000, 32
    logits2 = jax.random.normal(k3, (N2, C2), dtype=jnp.float32)
    targets2 = jax.random.randint(k4, (N2,), 0, C2, dtype=jnp.int32)
    loss2 = focal_loss(logits2, targets2)
    jax.block_until_ready(loss2)
    ref2 = _focal_loss_ref(logits2, targets2)
    assert jnp.allclose(loss2, ref2, atol=2e-5, rtol=2e-5), (loss2, ref2)

    # reduction='sum'
    loss_sum = focal_loss(logits2, targets2, reduction="sum")
    jax.block_until_ready(loss_sum)
    ref_sum = _focal_loss_ref(logits2, targets2, reduction="sum")
    assert jnp.allclose(loss_sum, ref_sum, atol=2e-4, rtol=2e-5), (loss_sum, ref_sum)

    # reduction='none' (per-sample vector).
    loss_none = focal_loss(logits, targets, reduction="none")
    jax.block_until_ready(loss_none)
    ref_none = _focal_loss_ref(logits, targets, reduction="none")
    assert jnp.allclose(loss_none, ref_none, atol=1e-5, rtol=1e-5)

    # bfloat16 logits path (upcast happens inside the kernel).
    logits_bf16 = logits2.astype(jnp.bfloat16)
    loss3 = focal_loss(logits_bf16, targets2)
    jax.block_until_ready(loss3)
    ref3 = _focal_loss_ref(logits_bf16, targets2)
    assert jnp.allclose(loss3, ref3, atol=2e-5, rtol=2e-5), (loss3, ref3)

    print("KERNEL_OK")
</pallas_src>

<mosaic_0001>
module attributes {stable_mosaic.version = 11 : i64} {
  func.func @_focal_sum_kernel(%arg0: i32, %arg1: i32, %arg2: memref<16x32xf32, #tpu.memory_space<vmem>>, %arg3: memref<16x1xi32, #tpu.memory_space<vmem>>, %arg4: memref<1x8x128xf32, #tpu.memory_space<vmem>>) attributes {dimension_semantics = [#tpu.dimension_semantics<parallel>, #tpu.dimension_semantics<arbitrary>], iteration_bounds = array<i64: 1, 1>, scalar_prefetch = 0 : i64, scratch_operands = 0 : i64, tpu.core_type = #tpu.core_type<tc>, window_params = [{transform_indices = @transform_0, window_bounds = array<i64: 16, 32>}, {transform_indices = @transform_1, window_bounds = array<i64: 16, 1>}, {transform_indices = @transform_2, window_bounds = array<i64: 1, 8, 128>}]} {
    %c0_i32 = arith.constant 0 : i32
    %0 = arith.cmpi eq, %arg1, %c0_i32 : i32
    %1 = arith.extui %0 : i1 to i32
    %c0_i32_0 = arith.constant 0 : i32
    %2 = arith.cmpi ne, %1, %c0_i32_0 : i32
    scf.if %2 {
      %cst_18 = arith.constant 0.000000e+00 : f32
      %51 = vector.broadcast %cst_18 : f32 to vector<1x8x128xf32>
      %c0_19 = arith.constant 0 : index
      %c0_20 = arith.constant 0 : index
      %c0_21 = arith.constant 0 : index
      %52 = vector.load %arg4[%c0_19, %c0_20, %c0_21] : memref<1x8x128xf32, #tpu.memory_space<vmem>>, vector<1x8x128xf32>
      tpu.vector_store %arg4[%c0_19, %c0_20, %c0_21], %51 {strides = array<i32>} : memref<1x8x128xf32, #tpu.memory_space<vmem>>, vector<1x8x128xf32>,
    } else {
    }
    %c0 = arith.constant 0 : index
    %c0_1 = arith.constant 0 : index
    %3 = vector.load %arg2[%c0, %c0_1] : memref<16x32xf32, #tpu.memory_space<vmem>>, vector<16x32xf32>
    %c0_2 = arith.constant 0 : index
    %c0_3 = arith.constant 0 : index
    %4 = vector.load %arg3[%c0_2, %c0_3] : memref<16x1xi32, #tpu.memory_space<vmem>>, vector<16x1xi32>
    %cst = arith.constant dense<0xFF800000> : vector<16xf32>
    %5 = vector.multi_reduction <maximumf>, %3, %cst [1] : vector<16x32xf32> to vector<16xf32>
    %6 = vector.shape_cast %5 : vector<16xf32> to vector<16x1xf32>
    %7 = vector.broadcast %6 : vector<16x1xf32> to vector<16x32xf32>
    %8 = arith.subf %3, %7 : vector<16x32xf32>
    %9 = math.exp %8 : vector<16x32xf32>
    %cst_4 = arith.constant dense<0.000000e+00> : vector<16xf32>
    %10 = vector.multi_reduction <add>, %9, %cst_4 [1] : vector<16x32xf32> to vector<16xf32>
    %11 = vector.shape_cast %10 : vector<16xf32> to vector<16x1xf32>
    %12 = tpu.iota {dimensions = array<i32: 1>} : vector<16x32xi32>
    %13 = vector.broadcast %4 : vector<16x1xi32> to vector<16x32xi32>
    %14 = arith.cmpi eq, %12, %13 : vector<16x32xi32>
    %15 = arith.extui %14 : vector<16x32xi1> to vector<16x32xi32>
    %16 = arith.sitofp %15 : vector<16x32xi32> to vector<16x32xf32>
    %17 = arith.mulf %16, %8 : vector<16x32xf32>
    %cst_5 = arith.constant dense<0.000000e+00> : vector<16xf32>
    %18 = vector.multi_reduction <add>, %17, %cst_5 [1] : vector<16x32xf32> to vector<16xf32>
    %19 = vector.shape_cast %18 : vector<16xf32> to vector<16x1xf32>
    %20 = math.log %11 : vector<16x1xf32>
    %21 = arith.subf %20, %19 : vector<16x1xf32>
    %cst_6 = arith.constant 0.000000e+00 : f32
    %22 = vector.broadcast %cst_6 : f32 to vector<16x1xf32>
    %23 = arith.subf %22, %21 : vector<16x1xf32>
    %24 = math.exp %23 : vector<16x1xf32>
    %cst_7 = arith.constant 1.000000e+00 : f32
    %25 = vector.broadcast %cst_7 : f32 to vector<16x1xf32>
    %26 = arith.subf %25, %24 : vector<16x1xf32>
    %cst_8 = arith.constant 0.000000e+00 : f32
    %27 = vector.broadcast %cst_8 : f32 to vector<16x1xf32>
    %28 = arith.maximumf %26, %27 : vector<16x1xf32>
    %29 = arith.mulf %28, %28 : vector<16x1xf32>
    %cst_9 = arith.constant 2.500000e-01 : f32
    %30 = vector.broadcast %cst_9 : f32 to vector<16x1xf32>
    %31 = arith.mulf %30, %29 : vector<16x1xf32>
    %32 = arith.mulf %31, %21 : vector<16x1xf32>
    %c1_i32 = arith.constant 1 : i32
    %33 = arith.muli %arg0, %c1_i32 : i32
    %34 = arith.addi %33, %arg1 : i32
    %c16_i32 = arith.constant 16 : i32
    %35 = arith.muli %34, %c16_i32 : i32
    %36 = tpu.iota {dimensions = array<i32: 0>} : vector<16x1xi32>
    %37 = vector.broadcast %35 : i32 to vector<16x1xi32>
    %38 = arith.addi %37, %36 : vector<16x1xi32>
    %c8_i32 = arith.constant 8 : i32
    %39 = vector.broadcast %c8_i32 : i32 to vector<16x1xi32>
    %40 = arith.cmpi slt, %38, %39 : vector<16x1xi32>
    %cst_10 = arith.constant 0.000000e+00 : f32
    %41 = vector.broadcast %cst_10 : f32 to vector<16x1xf32>
    %42 = arith.select %40, %32, %41 : vector<16x1xi1>, vector<16x1xf32>
    %c0_11 = arith.constant 0 : index
    %c0_12 = arith.constant 0 : index
    %c0_13 = arith.constant 0 : index
    %43 = vector.load %arg4[%c0_11, %c0_12, %c0_13] : memref<1x8x128xf32, #tpu.memory_space<vmem>>, vector<1x8x128xf32>
    %44 = vector.shape_cast %42 : vector<16x1xf32> to vector<1x16x1xf32>
    %cst_14 = arith.constant dense<0.000000e+00> : vector<1xf32>
    %45 = vector.multi_reduction <add>, %44, %cst_14 [1, 2] : vector<1x16x1xf32> to vector<1xf32>
    %46 = vector.shape_cast %45 : vector<1xf32> to vector<1x1x1xf32>
    %47 = vector.extract %46[0, 0, 0] : f32 from vector<1x1x1xf32>
    %48 = vector.broadcast %47 : f32 to vector<1x8x128xf32>
    %49 = arith.addf %43, %48 : vector<1x8x128xf32>
    %c0_15 = arith.constant 0 : index
    %c0_16 = arith.constant 0 : index
    %c0_17 = arith.constant 0 : index
    %50 = vector.load %arg4[%c0_15, %c0_16, %c0_17] : memref<1x8x128xf32, #tpu.memory_space<vmem>>, vector<1x8x128xf32>
    tpu.vector_store %arg4[%c0_15, %c0_16, %c0_17], %49 {strides = array<i32>} : memref<1x8x128xf32, #tpu.memory_space<vmem>>, vector<1x8x128xf32>,
    return
  }
  func.func @transform_0(%arg0: i32, %arg1: i32) -> (i32, i32) {
    %c1_i32 = arith.constant 1 : i32
    %0 = arith.muli %arg0, %c1_i32 : i32
    %1 = arith.addi %0, %arg1 : i32
    %c0_i32 = arith.constant 0 : i32
    %c0_i32_0 = arith.constant 0 : i32
    return %1, %c0_i32 : i32, i32
  }
  func.func @transform_1(%arg0: i32, %arg1: i32) -> (i32, i32) {
    %c1_i32 = arith.constant 1 : i32
    %0 = arith.muli %arg0, %c1_i32 : i32
    %1 = arith.addi %0, %arg1 : i32
    %c0_i32 = arith.constant 0 : i32
    %c0_i32_0 = arith.constant 0 : i32
    return %1, %c0_i32 : i32, i32
  }
  func.func @transform_2(%arg0: i32, %arg1: i32) -> (i32, i32, i32) {
    %c0_i32 = arith.constant 0 : i32
    %c0_i32_0 = arith.constant 0 : i32
    %c0_i32_1 = arith.constant 0 : i32
    return %arg0, %c0_i32, %c0_i32_0 : i32, i32, i32
  }
}

</mosaic_0001>

<llo_original>
// kernel: tpu_custom_call.1
$region0: #{tpu_custom_call.1}
  #allocation0 [shape = 'u32[]', space=smem, size = 0x4, offset = 0x4, fixed_abs, tag = 'smem constant byte address 0x4 - core index']
  #allocation1 [shape = 'u32[144,128]{1,0:T(1,128)}', space=vmem, size = 0x12000, scoped, tag = 'internal scratch']
  %s0 = inlined_call_operand.vmem [shape: f32[16,32], index: 0, kind: input, shape index: {}]
  %s1 = inlined_call_operand.vmem [shape: s32[16,1], index: 1, kind: input, shape index: {}]
  %s2 = inlined_call_operand.hbm [shape: f32[1,8,128], index: 2, kind: output, shape index: {}]
  %s3 = sld [smem:[#allocation0]]
  $region22: #{tpu_custom_call.1} parent=0
    _
  %s5 = ssub.s32 1, %s3
  %s6 = scalar_select 0, %s5, %s3
  $region1: #{tpu_custom_call.1} parent=0
    #allocation2 [shape = 'u8[4096]{0}', space=vmem, size = 0x1000, scoped, tag = 'output window, operand 0, single buffered']
    #allocation3 [shape = 's32[1]{0}', space=sflag, size = 0x4, scoped, tag = 'scoped memory for tpu_custom_call.1']
    %7 = vsyncpa [#allocation3], 0
    // Predicated region
    $region2: #{tpu_custom_call.1} parent=1 // pred_check
      _
    $region3: #{tpu_custom_call.1} parent=1 // pred_check_branch
      %9 = sbr.rel (0) target = $region5
    $region4: #{tpu_custom_call.1} parent=1 // pred_region
      %s10 = sadd.s32 0, 0
      %s11 = smul.u32 2, %s10
      %p12 = scmp.lt.s32.totalorder %s11, 1
      %s13 = scalar_select %p12, %s11, 1
      %s14 = smul.addr %s13, 8
      %s15 = scalar_lea.vmem %s0, %s14
      %s16 = sadd.s32 0, 0
      %s17 = smul.u32 2, %s16
    $region5: #{tpu_custom_call.1} parent=1 // pred_fallthru
      _
    // Predicated region
    $region6: #{tpu_custom_call.1} parent=1 // pred_check
      _
    $region7: #{tpu_custom_call.1} parent=1 // pred_check_branch
      %19 = sbr.rel (0) target = $region9
    $region8: #{tpu_custom_call.1} parent=1 // pred_region
      %s20 = sadd.s32 0, 0
      %s21 = smul.u32 2, %s20
      %p22 = scmp.lt.s32.totalorder %s21, 1
      %s23 = scalar_select %p22, %s21, 1
      %s24 = smul.addr %s23, 8
      %s25 = scalar_lea.vmem %s1, %s24
      %s26 = sadd.s32 0, 0
      %s27 = smul.u32 2, %s26
    $region9: #{tpu_custom_call.1} parent=1 // pred_fallthru
      _
    %s28 = sadd.s32 0, 0
    %s29 = smul.u32 2, %s28
    %p30 = scmp.lt.s32.totalorder %s29, 1
    %s31 = scalar_select %p30, %s29, 1
    %s32 = smul.addr %s31, 8
    %s33 = scalar_lea.vmem %s0, %s32
    %s34 = sadd.s32 0, 0
    %s35 = smul.u32 2, %s34
    %p36 = scmp.lt.s32.totalorder %s35, 1
    %s37 = scalar_select %p36, %s35, 1
    %s38 = smul.addr %s37, 8
    %s39 = scalar_lea.vmem %s1, %s38
    %s40 = sadd.s32 0, 0
    %s41 = smul.u32 2, %s40
    %p42 = scmp.lt.s32.totalorder %s41, 1
    %s43 = scalar_select %p42, %s41, 1
    %s44 = smul.addr %s43, 8
    %s45 = scalar_lea.vmem %s0, %s44
    %s46 = sadd.s32 0, 0
    %s47 = smul.u32 2, %s46
    %s48 = sadd.s32 0, 0
    %s49 = smul.u32 2, %s48
    %p50 = scmp.lt.s32.totalorder %s49, 1
    %s51 = scalar_select %p50, %s49, 1
    %s52 = smul.addr %s51, 8
    %s53 = scalar_lea.vmem %s1, %s52
    %s54 = sadd.s32 0, 0
    %s55 = smul.u32 2, %s54
    %p56 = scmp.eq.s32.totalorder 0, 0
    // Predicated region
    $region10: #{tpu_custom_call.1} parent=1 // pred_check
      %p57 = pneg %p56
    $region11: #{tpu_custom_call.1} parent=1 // pred_check_branch
      %59 = sbr.rel (%p57) target = $region13
    $region12: #{tpu_custom_call.1} parent=1 // pred_region
      %60 = vst [vmem:[#allocation2] sm:$0xff] 0.0
    $region13: #{tpu_custom_call.1} parent=1 // pred_fallthru
      _
    %v61 = vld [vmem:[%s45] sm:$0xff]
    %v62 = vld [vmem:[%s45 + $0x8] sm:$0xff]
    %v63 = vld [vmem:[%s53] sm:$0xff]
    %v64 = vld [vmem:[%s53 + $0x8] sm:$0xff]
    %vm65 = vcmask 261120
    %v66 = vsel %vm65, %v61, -inf
    %67 = vmax.xlane.f32.xlu0 %v66
    %v68 = vpop.xlane.xlu0 %67
    %v69 = vsel %vm65, %v62, -inf
    %70 = vmax.xlane.f32.xlu0 %v69
    %v71 = vpop.xlane.xlu0 %70
    %v72 = vsub.f32 %v61, %v68
    %v73 = vsub.f32 %v62, %v71
    %v74 = vmul.f32 %v72, 1.442695
    %v75 = vpow.pop %v74
    %v76 = vmul.f32 %v73, 1.442695
    %v77 = vpow.pop %v76
    %v78 = vsel %vm65, %v75, 0.0
    %79 = vadd.xlane.f32.xlu0 %v78
    %v80 = vpop.xlane.xlu0 %79
    %v81 = vsel %vm65, %v77, 0.0
    %82 = vadd.xlane.f32.xlu0 %v81
    %v83 = vpop.xlane.xlu0 %82
    %v84 = vlaneseq
    %v85 = vand.u32 %v84, 127
    %86 = vset.pattern.permute.xlu0 0
    %87 = vperm.xlu0 %86, %v63
    %v88 = vpop.permute.xlu0 %87
    %89 = vset.pattern.permute.xlu0 0
    %90 = vperm.xlu0 %89, %v64
    %v91 = vpop.permute.xlu0 %90
    %vm92 = vcmp.eq.s32.totalorder %v85, %v88
    %vm93 = vcmp.eq.s32.totalorder %v85, %v91
    %v94 = vsel %vm92, 1, 0
    %v95 = vsel %vm93, 1, 0
    %v96 = vcvt.s32.f32 %v94
    %v97 = vcvt.s32.f32 %v95
    %v98 = vmul.f32 %v96, %v72
    %v99 = vmul.f32 %v97, %v73
    %v100 = vsel %vm65, %v98, 0.0
    %101 = vadd.xlane.f32.xlu0 %v100
    %v102 = vpop.xlane.xlu0 %101
    %v103 = vsel %vm65, %v99, 0.0
    %104 = vadd.xlane.f32.xlu0 %v103
    %v105 = vpop.xlane.xlu0 %104
    %v106 = vlog2.pop %v80
    %v107 = vmul.f32 %v106, 0.6931472
    %v108 = vlog2.pop %v83
    %v109 = vmul.f32 %v108, 0.6931472
    %v110 = vsub.f32 %v107, %v102
    %v111 = vsub.f32 %v109, %v105
    %v112 = vsub.f32 0.0, %v110
    %v113 = vsub.f32 0.0, %v111
    %v114 = vmul.f32 %v112, 1.442695
    %v115 = vpow.pop %v114
    %v116 = vmul.f32 %v113, 1.442695
    %v117 = vpow.pop %v116
    %v118 = vsub.f32 1.0, %v115
    %v119 = vsub.f32 1.0, %v117
    %v120 = vmax.f32 %v118, 0.0
    %v121 = vmax.f32 %v119, 0.0
    %v122 = vmul.f32 %v120, %v120
    %v123 = vmul.f32 %v121, %v121
    %v124 = vmul.f32 %v122, 0.25
    %v125 = vmul.f32 %v123, 0.25
    %v126 = vmul.f32 %v124, %v110
    %v127 = vmul.f32 %v125, %v111
    %s128 = sadd.s32 0, 0
    %s129 = smul.u32 %s128, 16
    %v130 = vlaneseq
    %v131 = vshrl.u32 %v130, 7
    %v132 = vadd.s32 %v131, 8
    %v133 = vstv %s129
    %v134 = vadd.s32 %v133, %v131
    %v135 = vadd.s32 %v133, %v132
    %vm136 = vcmp.lt.s32.totalorder %v134, 8
    %vm137 = vcmp.lt.s32.totalorder %v135, 8
    %v138 = vsel %vm136, %v126, 0.0
    %v139 = vsel %vm137, %v127, 0.0
    %v140 = vld [vmem:[#allocation2] sm:$0xff]
    %vm141 = vcmask 7168
    %v142 = vsel %vm141, %v138, 0.0
    %v143 = vsel %vm141, %v139, 0.0
    %v144 = vadd.f32 %v142, %v143
    %145 = vadd.xlane.f32.xlu0 %v144
    %v146 = vpop.xlane.xlu0 %145
    %v147 = vrot.slane %v146, 4
    %v148 = vadd.f32 %v146, %v147
    %v149 = vrot.slane %v148, 2
    %v150 = vadd.f32 %v148, %v149
    %v151 = vrot.slane %v150, 1
    %v152 = vadd.f32 %v150, %v151
    %s153 = vtos %v152
    %v154 = vstv %s153
    %v155 = vadd.f32 %v140, %v154
    %156 = vst [vmem:[#allocation2] sm:$0xff] %v155
    // Predicated region
    $region14: #{tpu_custom_call.1} parent=1 // pred_check
      _
    $region15: #{tpu_custom_call.1} parent=1 // pred_check_branch
      %158 = sbr.rel (0) target = $region17
    $region16: #{tpu_custom_call.1} parent=1 // pred_region
      %s160 = ssub.s32 128, 128
      %161 = vsyncadd [#allocation3], %s160
      %s163 = sshll.u32 [#allocation2], 4
      %s164 = int_to_ptr.vmem [resolvable:$true] %s163
      %166 = dma.vmem_to_hbm [thread:$0]  %s164, 128, %s2, [#allocation3]
    $region17: #{tpu_custom_call.1} parent=1 // pred_fallthru
      _
    // Predicated region
    $region18: #{tpu_custom_call.1} parent=1 // pred_check
      _
    $region19: #{tpu_custom_call.1} parent=1 // pred_check_branch
      %168 = sbr.rel (0) target = $region21
    $region20: #{tpu_custom_call.1} parent=1 // pred_region
      %169 = dma.done [#allocation3], 128
    $region21: #{tpu_custom_call.1} parent=1 // pred_fallthru
      _
    %170 = vsyncpa [#allocation3], 1

</llo_original>
